<compile_context>
chip_gen: v6e
topology: v6e:2x2x1
jax: 0.10.0
libtpu: 0.0.40
codegen_flags: <defaults>
</compile_context>

<pallas_src>
import functools

import jax
import jax.numpy as jnp
from jax import lax
from jax.experimental import pallas as pl
from jax.experimental.pallas import tpu as pltpu

LANES = 128


def _wprl_kernel(r_ref, t_ref, out_ref, *, groups):
    """Accumulate per-tile partial counts into the resident (24, 128) int32 block.

    Output block layout (rows):
      [ 0: 8)  count of positions with target == 0
      [ 8:16)  count of positions with recon != target          (all positions)
      [16:24)  count of positions with target == 0 and recon != target
    """
    k = pl.program_id(0)

    @pl.when(k == 0)
    def _init():
        out_ref[...] = jnp.zeros_like(out_ref)

    t = t_ref[...]
    r = r_ref[...]

    zero_b = t == 0
    mis_b = r != t
    zero_i = zero_b.astype(jnp.int32)
    mis_i = mis_b.astype(jnp.int32)
    zero_mis_i = jnp.where(mis_b, zero_i, 0)

    def fold(x):
        # (tile_rows, 128) -> (8, 128): sums whole (8,128) vreg groups.
        # Pure VALU adds, layout-free (splits the leading dim on vreg boundaries).
        return jnp.sum(x.reshape(groups, 8, LANES), axis=0)

    # Direct static-sliced accumulation — no concatenated temporary.
    out_ref[0:8, :] += fold(zero_i)
    out_ref[8:16, :] += fold(mis_i)
    out_ref[16:24, :] += fold(zero_mis_i)


def weighted_perfect_recovery_loss(
    reconstructed_image,
    target_image,
    zero_weighting=1.0,
    nonzero_weighting=1.0,
    max_tile_rows=4096,
):
    assert reconstructed_image.shape == target_image.shape
    assert reconstructed_image.dtype == target_image.dtype
    n = int(reconstructed_image.size)

    r_flat = reconstructed_image.reshape(-1)
    t_flat = target_image.reshape(-1)

    # Sublane granularity: packed dtypes (bf16/int8) pack along sublanes, so keep the
    # row-tile a multiple of the native sublane tile for the input dtype.
    itemsize = jnp.dtype(reconstructed_image.dtype).itemsize
    packing = max(1, 4 // max(1, itemsize))   # f32 -> 1, bf16 -> 2, int8 -> 4
    sub = 8 * packing

    full_rows = n // LANES           # number of complete 128-lane rows
    usable = full_rows * LANES       # elements covered by complete rows

    tile_rows = min(max_tile_rows, full_rows)
    tile_rows = (tile_rows // sub) * sub
    steps = full_rows // tile_rows if tile_rows > 0 else 0
    main_rows = steps * tile_rows
    main_elems = main_rows * LANES   # elements covered by the Pallas grid

    zero_n = jnp.int32(0)
    mis_total = jnp.int32(0)
    zero_mis = jnp.int32(0)

    if steps > 0:
        if usable == n:
            # Pure bitcast reshape: no HBM copy. The grid visits only the first
            # `main_rows` rows; the remainder is handled in the epilogue below.
            r2 = r_flat.reshape(full_rows, LANES)
            t2 = t_flat.reshape(full_rows, LANES)
        else:
            # TODO(synk): n % 128 != 0 forces one HBM copy of the 128-aligned prefix
            # per input (XLA slice feeding a custom call); rare for image tensors.
            r2 = lax.slice(r_flat, (0,), (usable,)).reshape(full_rows, LANES)
            t2 = lax.slice(t_flat, (0,), (usable,)).reshape(full_rows, LANES)

        kernel = functools.partial(_wprl_kernel, groups=tile_rows // 8)
        row_block = lambda k: (k, 0)

        partials = pl.pallas_call(
            kernel,
            out_shape=jax.ShapeDtypeStruct((24, LANES), jnp.int32),
            grid_spec=pltpu.PrefetchScalarGridSpec(
                num_scalar_prefetch=0,
                grid=(steps,),
                in_specs=[
                    pl.BlockSpec((tile_rows, LANES), row_block),
                    pl.BlockSpec((tile_rows, LANES), row_block),
                ],
                out_specs=pl.BlockSpec((24, LANES), lambda k: (0, 0)),
            ),
            compiler_params=pltpu.CompilerParams(
                dimension_semantics=("arbitrary",),
                # 2 inputs x 2 buffers x <=2 MiB tiles + (24,128) accumulator —
                # well under 32 MiB, which is safe on v5e / v6e / v7x alike.
                vmem_limit_bytes=32 * 1024 * 1024,
            ),
        )(r2, t2)

        zero_n = zero_n + jnp.sum(partials[0:8, :])
        mis_total = mis_total + jnp.sum(partials[8:16, :])
        zero_mis = zero_mis + jnp.sum(partials[16:24, :])

    # Ragged tail (< one tile + partial last row): fused XLA reduction, tiny HBM read.
    if main_elems < n:
        r_tail = lax.slice(r_flat, (main_elems,), (n,))
        t_tail = lax.slice(t_flat, (main_elems,), (n,))
        tz = t_tail == 0
        tm = r_tail != t_tail
        zero_n = zero_n + jnp.sum(tz.astype(jnp.int32))
        mis_total = mis_total + jnp.sum(tm.astype(jnp.int32))
        zero_mis = zero_mis + jnp.sum(jnp.logical_and(tz, tm).astype(jnp.int32))

    nonzero_n = n - zero_n                    # n is static -> derived, not accumulated
    nonzero_mis = mis_total - zero_mis

    zero_n_f = zero_n.astype(jnp.float32)
    nonzero_n_f = nonzero_n.astype(jnp.float32)
    zero_loss = jnp.where(
        zero_n > 0,
        zero_weighting * zero_mis.astype(jnp.float32) / jnp.maximum(zero_n_f, 1.0),
        0.0,
    )
    nonzero_loss = jnp.where(
        nonzero_n > 0,
        nonzero_weighting * nonzero_mis.astype(jnp.float32) / jnp.maximum(nonzero_n_f, 1.0),
        0.0,
    )
    return zero_loss + nonzero_loss


def _reference_loss(recon, target, zero_weighting=1.0, nonzero_weighting=1.0):
    """Pure-JAX reference reproducing the PyTorch forward semantics."""
    r = recon.reshape(-1)
    t = target.reshape(-1)
    zero_mask = t == 0
    nonzero_mask = ~zero_mask
    zero_n = jnp.sum(zero_mask.astype(jnp.float32))
    nonzero_n = jnp.sum(nonzero_mask.astype(jnp.float32))
    mismatch = r != t
    zero_mis = jnp.sum(jnp.logical_and(zero_mask, mismatch).astype(jnp.float32))
    nonzero_mis = jnp.sum(jnp.logical_and(nonzero_mask, mismatch).astype(jnp.float32))
    zero_loss = jnp.where(
        zero_n > 0, zero_weighting * zero_mis / jnp.maximum(zero_n, 1.0), 0.0
    )
    nonzero_loss = jnp.where(
        nonzero_n > 0, nonzero_weighting * nonzero_mis / jnp.maximum(nonzero_n, 1.0), 0.0
    )
    return zero_loss + nonzero_loss


if __name__ == "__main__":
    key = jax.random.PRNGKey(0)
    k1, k2, k3, k4 = jax.random.split(key, 4)
    shape = (2, 4, 16, 16)

    # Target with ~50% exact zeros; reconstruction equals target on ~60% of the
    # positions and is random noise elsewhere, so both zero- and nonzero-region
    # mismatches occur.
    target_image = jax.random.uniform(k1, shape, jnp.float32, minval=0.1, maxval=1.0)
    zero_sel = jax.random.bernoulli(k2, 0.5, shape)
    target_image = jnp.where(zero_sel, 0.0, target_image)

    noise = jax.random.uniform(k3, shape, jnp.float32, minval=0.1, maxval=1.0)
    match_sel = jax.random.bernoulli(k4, 0.6, shape)
    reconstructed_image = jnp.where(match_sel, target_image, noise)

    loss = weighted_perfect_recovery_loss(
        reconstructed_image, target_image, zero_weighting=1.0, nonzero_weighting=1.0
    )
    loss = jax.block_until_ready(loss)

    ref = _reference_loss(reconstructed_image, target_image, 1.0, 1.0)
    assert jnp.allclose(loss, ref, atol=1e-6), (loss, ref)

    print("KERNEL_OK")
</pallas_src>

<mosaic_0001>
module attributes {stable_mosaic.version = 11 : i64} {
  func.func @_wprl_kernel(%arg0: i32, %arg1: memref<16x128xf32, #tpu.memory_space<vmem>>, %arg2: memref<16x128xf32, #tpu.memory_space<vmem>>, %arg3: memref<24x128xi32, #tpu.memory_space<vmem>>) attributes {dimension_semantics = [#tpu.dimension_semantics<arbitrary>], iteration_bounds = array<i64: 1>, scalar_prefetch = 0 : i64, scratch_operands = 0 : i64, tpu.core_type = #tpu.core_type<tc>, window_params = [{transform_indices = @transform_0, window_bounds = array<i64: 16, 128>}, {transform_indices = @transform_1, window_bounds = array<i64: 16, 128>}, {pipeline_mode = #tpu.pipeline_mode<synchronous>, transform_indices = @transform_2, window_bounds = array<i64: 24, 128>}]} {
    %c0_i32 = arith.constant 0 : i32
    %0 = arith.cmpi eq, %arg0, %c0_i32 : i32
    %1 = arith.extui %0 : i1 to i32
    %c0_i32_0 = arith.constant 0 : i32
    %2 = arith.cmpi ne, %1, %c0_i32_0 : i32
    scf.if %2 {
      %c0_i32_18 = arith.constant 0 : i32
      %27 = vector.broadcast %c0_i32_18 : i32 to vector<24x128xi32>
      %c0_19 = arith.constant 0 : index
      %c0_20 = arith.constant 0 : index
      %28 = vector.load %arg3[%c0_19, %c0_20] : memref<24x128xi32, #tpu.memory_space<vmem>>, vector<24x128xi32>
      tpu.vector_store %arg3[%c0_19, %c0_20], %27 {strides = array<i32>} : memref<24x128xi32, #tpu.memory_space<vmem>>, vector<24x128xi32>,
    } else {
    }
    %c0 = arith.constant 0 : index
    %c0_1 = arith.constant 0 : index
    %3 = vector.load %arg2[%c0, %c0_1] : memref<16x128xf32, #tpu.memory_space<vmem>>, vector<16x128xf32>
    %c0_2 = arith.constant 0 : index
    %c0_3 = arith.constant 0 : index
    %4 = vector.load %arg1[%c0_2, %c0_3] : memref<16x128xf32, #tpu.memory_space<vmem>>, vector<16x128xf32>
    %cst = arith.constant 0.000000e+00 : f32
    %5 = vector.broadcast %cst : f32 to vector<16x128xf32>
    %6 = arith.cmpf oeq, %3, %5 : vector<16x128xf32>
    %7 = arith.cmpf one, %4, %3 : vector<16x128xf32>
    %8 = arith.extui %6 : vector<16x128xi1> to vector<16x128xi32>
    %9 = arith.extui %7 : vector<16x128xi1> to vector<16x128xi32>
    %c0_i32_4 = arith.constant 0 : i32
    %10 = vector.broadcast %c0_i32_4 : i32 to vector<16x128xi32>
    %11 = arith.select %7, %8, %10 : vector<16x128xi1>, vector<16x128xi32>
    %c0_5 = arith.constant 0 : index
    %c0_6 = arith.constant 0 : index
    %12 = vector.load %arg3[%c0_5, %c0_6] : memref<24x128xi32, #tpu.memory_space<vmem>>, vector<8x128xi32>
    %13 = vector.shape_cast %8 : vector<16x128xi32> to vector<2x8x128xi32>
    %cst_7 = arith.constant dense<0> : vector<8x128xi32>
    %14 = vector.multi_reduction <add>, %13, %cst_7 [0] : vector<2x8x128xi32> to vector<8x128xi32>
    %15 = arith.addi %12, %14 : vector<8x128xi32>
    %c0_8 = arith.constant 0 : index
    %c0_9 = arith.constant 0 : index
    %16 = vector.load %arg3[%c0_8, %c0_9] : memref<24x128xi32, #tpu.memory_space<vmem>>, vector<8x128xi32>
    tpu.vector_store %arg3[%c0_8, %c0_9], %15 {strides = array<i32>} : memref<24x128xi32, #tpu.memory_space<vmem>>, vector<8x128xi32>,
    %c8 = arith.constant 8 : index
    %c0_10 = arith.constant 0 : index
    %17 = vector.load %arg3[%c8, %c0_10] : memref<24x128xi32, #tpu.memory_space<vmem>>, vector<8x128xi32>
    %18 = vector.shape_cast %9 : vector<16x128xi32> to vector<2x8x128xi32>
    %cst_11 = arith.constant dense<0> : vector<8x128xi32>
    %19 = vector.multi_reduction <add>, %18, %cst_11 [0] : vector<2x8x128xi32> to vector<8x128xi32>
    %20 = arith.addi %17, %19 : vector<8x128xi32>
    %c8_12 = arith.constant 8 : index
    %c0_13 = arith.constant 0 : index
    %21 = vector.load %arg3[%c8_12, %c0_13] : memref<24x128xi32, #tpu.memory_space<vmem>>, vector<8x128xi32>
    tpu.vector_store %arg3[%c8_12, %c0_13], %20 {strides = array<i32>} : memref<24x128xi32, #tpu.memory_space<vmem>>, vector<8x128xi32>,
    %c16 = arith.constant 16 : index
    %c0_14 = arith.constant 0 : index
    %22 = vector.load %arg3[%c16, %c0_14] : memref<24x128xi32, #tpu.memory_space<vmem>>, vector<8x128xi32>
    %23 = vector.shape_cast %11 : vector<16x128xi32> to vector<2x8x128xi32>
    %cst_15 = arith.constant dense<0> : vector<8x128xi32>
    %24 = vector.multi_reduction <add>, %23, %cst_15 [0] : vector<2x8x128xi32> to vector<8x128xi32>
    %25 = arith.addi %22, %24 : vector<8x128xi32>
    %c16_16 = arith.constant 16 : index
    %c0_17 = arith.constant 0 : index
    %26 = vector.load %arg3[%c16_16, %c0_17] : memref<24x128xi32, #tpu.memory_space<vmem>>, vector<8x128xi32>
    tpu.vector_store %arg3[%c16_16, %c0_17], %25 {strides = array<i32>} : memref<24x128xi32, #tpu.memory_space<vmem>>, vector<8x128xi32>,
    return
  }
  func.func @transform_0(%arg0: i32) -> (i32, i32) {
    %c0_i32 = arith.constant 0 : i32
    %c0_i32_0 = arith.constant 0 : i32
    return %arg0, %c0_i32 : i32, i32
  }
  func.func @transform_1(%arg0: i32) -> (i32, i32) {
    %c0_i32 = arith.constant 0 : i32
    %c0_i32_0 = arith.constant 0 : i32
    return %arg0, %c0_i32 : i32, i32
  }
  func.func @transform_2(%arg0: i32) -> (i32, i32) {
    %c0_i32 = arith.constant 0 : i32
    %c0_i32_0 = arith.constant 0 : i32
    %c0_i32_1 = arith.constant 0 : i32
    return %c0_i32, %c0_i32_0 : i32, i32
  }
}

</mosaic_0001>

<llo_original>
// kernel: tpu_custom_call.1
$region0: #{tpu_custom_call.1}
  #allocation0 [shape = 'u32[]', space=smem, size = 0x4, offset = 0x4, fixed_abs, tag = 'smem constant byte address 0x4 - core index']
  #allocation1 [shape = 'u32[144,128]{1,0:T(1,128)}', space=vmem, size = 0x12000, scoped, tag = 'internal scratch']
  %s0 = inlined_call_operand.hbm [shape: f32[16,128], index: 0, kind: input, shape index: {}]
  %s1 = inlined_call_operand.hbm [shape: f32[16,128], index: 1, kind: input, shape index: {}]
  %s2 = inlined_call_operand.hbm [shape: s32[24,128], index: 2, kind: output, shape index: {}]
  %s3 = sld [smem:[#allocation0]]
  $region30: #{tpu_custom_call.1} parent=0
    _
  %s5 = ssub.s32 1, %s3
  %s6 = scalar_select 0, %s5, %s3
  $region1: #{tpu_custom_call.1} parent=0
    #allocation2 [shape = 'u8[8192]{0}', space=vmem, size = 0x2000, scoped, tag = 'input window, operand 0, single buffered']
    #allocation3 [shape = 's32[1]{0}', space=sflag, size = 0x4, scoped, tag = 'scoped memory for tpu_custom_call.1']
    #allocation4 [shape = 's32[1]{0}', space=sflag, size = 0x4, scoped, tag = 'scoped memory for tpu_custom_call.1']
    #allocation5 [shape = 'u8[8192]{0}', space=vmem, size = 0x2000, scoped, tag = 'input window, operand 1, single buffered']
    #allocation6 [shape = 's32[1]{0}', space=sflag, size = 0x4, scoped, tag = 'scoped memory for tpu_custom_call.1']
    #allocation7 [shape = 'u8[12288]{0}', space=vmem, size = 0x3000, scoped, tag = 'output window, operand 0, single buffered']
    %7 = vsyncpa [#allocation3], 0
    %8 = vsyncpa [#allocation6], 0
    %9 = vsyncpa [#allocation4], 0
    // Predicated region
    $region2: #{tpu_custom_call.1} parent=1 // pred_check
      _
    $region3: #{tpu_custom_call.1} parent=1 // pred_check_branch
      %11 = sbr.rel (0) target = $region5
    $region4: #{tpu_custom_call.1} parent=1 // pred_region
      %s13 = ssub.s32 256, 256
      %14 = vsyncadd [#allocation3], %s13
      %s15 = sshll.u32 [#allocation2], 4
      %s16 = int_to_ptr.vmem [resolvable:$true] %s15
      %21 = dma.hbm_to_vmem [thread:$0]  %s0, 256, %s16, [#allocation3], 128, 128, 8
    $region5: #{tpu_custom_call.1} parent=1 // pred_fallthru
      _
    // Predicated region
    $region6: #{tpu_custom_call.1} parent=1 // pred_check
      _
    $region7: #{tpu_custom_call.1} parent=1 // pred_check_branch
      %23 = sbr.rel (0) target = $region9
    $region8: #{tpu_custom_call.1} parent=1 // pred_region
      %s25 = ssub.s32 256, 256
      %26 = vsyncadd [#allocation6], %s25
      %s27 = sshll.u32 [#allocation5], 4
      %s28 = int_to_ptr.vmem [resolvable:$true] %s27
      %33 = dma.hbm_to_vmem [thread:$0]  %s1, 256, %s28, [#allocation6], 128, 128, 8
    $region9: #{tpu_custom_call.1} parent=1 // pred_fallthru
      _
    // Predicated region
    $region10: #{tpu_custom_call.1} parent=1 // pred_check
      _
    $region11: #{tpu_custom_call.1} parent=1 // pred_check_branch
      %35 = sbr.rel (0) target = $region13
    $region12: #{tpu_custom_call.1} parent=1 // pred_region
      %36 = dma.done [#allocation3], 256
    $region13: #{tpu_custom_call.1} parent=1 // pred_fallthru
      _
    // Predicated region
    $region14: #{tpu_custom_call.1} parent=1 // pred_check
      _
    $region15: #{tpu_custom_call.1} parent=1 // pred_check_branch
      %38 = sbr.rel (0) target = $region17
    $region16: #{tpu_custom_call.1} parent=1 // pred_region
      %39 = dma.done [#allocation6], 256
    $region17: #{tpu_custom_call.1} parent=1 // pred_fallthru
      _
    %p40 = scmp.eq.s32.totalorder 0, 0
    // Predicated region
    $region18: #{tpu_custom_call.1} parent=1 // pred_check
      %p41 = pneg %p40
    $region19: #{tpu_custom_call.1} parent=1 // pred_check_branch
      %43 = sbr.rel (%p41) target = $region21
    $region20: #{tpu_custom_call.1} parent=1 // pred_region
      %44 = vst [vmem:[#allocation7] sm:$0xff] 0
      %45 = vst [vmem:[#allocation7 + $0x8] sm:$0xff] 0
      %46 = vst [vmem:[#allocation7 + $0x10] sm:$0xff] 0
    $region21: #{tpu_custom_call.1} parent=1 // pred_fallthru
      _
    %v47 = vld [vmem:[#allocation5] sm:$0xff]
    %v48 = vld [vmem:[#allocation5 + $0x8] sm:$0xff]
    %v49 = vld [vmem:[#allocation2] sm:$0xff]
    %v50 = vld [vmem:[#allocation2 + $0x8] sm:$0xff]
    %vm51 = vcmp.eq.f32.partialorder %v47, 0.0
    %vm52 = vcmp.eq.f32.partialorder %v48, 0.0
    %vm53 = vcmp.ne.f32.partialorder %v49, %v47
    %vm54 = vcmp.ne.f32.partialorder %v50, %v48
    %v55 = vsel %vm51, 1, 0
    %v56 = vsel %vm52, 1, 0
    %v57 = vsel %vm53, 1, 0
    %v58 = vsel %vm54, 1, 0
    %v59 = vsel %vm53, %v55, 0
    %v60 = vsel %vm54, %v56, 0
    %v61 = vld [vmem:[#allocation7] sm:$0xff]
    %v62 = vadd.s32 %v55, %v56
    %v63 = vadd.s32 %v61, %v62
    %64 = vst [vmem:[#allocation7] sm:$0xff] %v63
    %v65 = vld [vmem:[#allocation7 + $0x8] sm:$0xff]
    %v66 = vadd.s32 %v57, %v58
    %v67 = vadd.s32 %v65, %v66
    %68 = vst [vmem:[#allocation7 + $0x8] sm:$0xff] %v67
    %v69 = vld [vmem:[#allocation7 + $0x10] sm:$0xff]
    %v70 = vadd.s32 %v59, %v60
    %v71 = vadd.s32 %v69, %v70
    %72 = vst [vmem:[#allocation7 + $0x10] sm:$0xff] %v71
    // Predicated region
    $region22: #{tpu_custom_call.1} parent=1 // pred_check
      _
    $region23: #{tpu_custom_call.1} parent=1 // pred_check_branch
      %74 = sbr.rel (0) target = $region25
    $region24: #{tpu_custom_call.1} parent=1 // pred_region
      %s76 = ssub.s32 384, 384
      %77 = vsyncadd [#allocation4], %s76
      %s78 = sshll.u32 [#allocation7], 4
      %s79 = int_to_ptr.vmem [resolvable:$true] %s78
      %84 = dma.vmem_to_hbm [thread:$0]  %s79, 384, %s2, [#allocation4], 128, 128, 8
    $region25: #{tpu_custom_call.1} parent=1 // pred_fallthru
      _
    // Predicated region
    $region26: #{tpu_custom_call.1} parent=1 // pred_check
      _
    $region27: #{tpu_custom_call.1} parent=1 // pred_check_branch
      %86 = sbr.rel (0) target = $region29
    $region28: #{tpu_custom_call.1} parent=1 // pred_region
      %87 = dma.done [#allocation4], 384
    $region29: #{tpu_custom_call.1} parent=1 // pred_fallthru
      _
    %88 = vsyncpa [#allocation3], 1
    %89 = vsyncpa [#allocation6], 1
    %90 = vsyncpa [#allocation4], 1

</llo_original>
